<compile_context>
chip_gen: v7x
topology: tpu7x:2x2x1
jax: 0.10.0
libtpu: 0.0.40
codegen_flags: <defaults>
</compile_context>

<pallas_src>
import functools

import jax
import jax.numpy as jnp
from jax.experimental import pallas as pl
from jax.experimental.pallas import tpu as pltpu


# --------------------------------------------------------------------------
# helpers
# --------------------------------------------------------------------------
def _round_up(a, b):
    return ((a + b - 1) // b) * b


def _plan_tiles(M, tile_m):
    """Pick (tile, padded_M) for the (B,L,K)-interface wrapper.

    Large tiles amortize the ~0.35 us per-grid-step overhead; when there is
    enough work we keep >= 2 grid steps so dimension_semantics=("parallel",)
    can shard across v7x's two TensorCores.  padded_M is always a multiple of
    the tile, so the kernel grid divides evenly.
    """
    Mq = _round_up(max(M, 1), 128)
    tm = min(_round_up(max(tile_m, 1), 128), Mq)
    if Mq >= 256:                                   # enough work for 2 steps
        tm = min(tm, _round_up((M + 1) // 2, 128))
    M_pad = _round_up(M, tm)
    return tm, M_pad


def _largest_divisor_tile(M, tile_m):
    """Largest multiple of 128 that divides M, is <= tile_m, and (when there
    is enough work) leaves at least 2 grid steps for v7x's 2 TensorCores."""
    assert M % 128 == 0
    cap = min(tile_m, M if M < 256 else M // 2)
    cap = max(128, (cap // 128) * 128)
    best = 128
    for cand in range(128, cap + 1, 128):
        if M % cand == 0:
            best = cand
    return best


def _elu(pre_f32, cdt):
    """ELU (alpha=1), computed in `cdt` (f32 exact path or bf16 fast path).

    The exp argument is clamped so the unselected branch never produces inf.
    """
    v = pre_f32.astype(cdt)
    return jnp.where(v > 0, v, jnp.exp(jnp.minimum(v, 0)) - 1).astype(cdt)


# --------------------------------------------------------------------------
# kernel
# --------------------------------------------------------------------------
def channel_ae_kernel(x_ref, noise_ref,
                      we1_ref, be1_ref, we2_ref, be2_ref,
                      wd1_ref, bd1_ref, wd2_ref, bd2_ref,
                      xdec_ref, codes_ref, *, compute_dtype):
    """All activations are laid out (features, TILE_M): samples dense on lanes."""
    cdt = compute_dtype
    f32 = jnp.float32

    x = x_ref[...].astype(cdt)                                         # (K, TM)

    # ---------------- encoder ----------------
    h1 = jnp.dot(we1_ref[...], x, preferred_element_type=f32) + be1_ref[...]
    h1 = _elu(h1, cdt)                                                 # (H, TM)
    c_pre = jnp.dot(we2_ref[...], h1, preferred_element_type=f32) + be2_ref[...]
    codes_f32 = jnp.tanh(c_pre.astype(cdt)).astype(f32)                # (N, TM)
    codes_ref[...] = codes_f32

    # ---------------- channel (AWGN) ----------------
    received = (codes_f32 + noise_ref[...]).astype(cdt)                # (N, TM)
    # TODO(synk): args.rec_quantize (MyQuantize STE) would be applied here.

    # ---------------- decoder ----------------
    h2 = jnp.dot(wd1_ref[...], received, preferred_element_type=f32) + bd1_ref[...]
    h2 = _elu(h2, cdt)                                                 # (H, TM)
    d_pre = jnp.dot(wd2_ref[...], h2, preferred_element_type=f32) + bd2_ref[...]
    # sigmoid(x) == 0.5*tanh(0.5*x) + 0.5 : one EUP op instead of exp + recip.
    xdec_ref[...] = (
        0.5 * jnp.tanh(0.5 * d_pre.astype(cdt)).astype(f32) + 0.5)     # (K, TM)


# --------------------------------------------------------------------------
# wrappers
# --------------------------------------------------------------------------
def prepare_params(params, compute_dtype=jnp.float32):
    """PyTorch-layout params (W:(in,out), b:(1,out)) -> kernel layout
    (W:(out,in) cast to compute_dtype, b:(out,1) kept f32).  Done once."""
    we1, be1, we2, be2, wd1, bd1, wd2, bd2 = params
    f32 = jnp.float32
    return (we1.T.astype(compute_dtype), be1.reshape(-1, 1).astype(f32),
            we2.T.astype(compute_dtype), be2.reshape(-1, 1).astype(f32),
            wd1.T.astype(compute_dtype), bd1.reshape(-1, 1).astype(f32),
            wd2.T.astype(compute_dtype), bd2.reshape(-1, 1).astype(f32))


def channel_ae_forward_lane_major(x_t, noise_t, params_t, *,
                                  tile_m=8192,
                                  compute_dtype=jnp.float32,
                                  vmem_limit_bytes=48 * 1024 * 1024):
    """Layout-native entry point (zero wrapper-side layout passes).

    x_t: (K, M) f32, noise_t: (N, M) f32, M a multiple of 128.
    Returns (x_dec_t (K, M) f32, codes_t (N, M) f32).
    """
    K, M = x_t.shape
    N, M2 = noise_t.shape
    if M != M2 or M % 128 != 0:
        raise ValueError("lane-major inputs need matching M, multiple of 128")
    we1_t, be1_t, we2_t, be2_t, wd1_t, bd1_t, wd2_t, bd2_t = params_t
    H = we1_t.shape[0]

    tm = _largest_divisor_tile(M, tile_m)
    grid = (M // tm,)

    def const_spec(shape):
        # Constant index_map: weights/biases are DMA'd once and stay resident.
        nd = len(shape)
        return pl.BlockSpec(shape, lambda i, _nd=nd: (0,) * _nd)

    kernel = functools.partial(channel_ae_kernel, compute_dtype=compute_dtype)

    flops = 2 * M * (K * H + H * N + N * H + H * K)
    transcendentals = M * (2 * H + N + K)
    param_bytes = sum(int(p.size) * p.dtype.itemsize for p in params_t)
    bytes_accessed = 4 * M * 2 * (K + N) + param_bytes

    xdec_t, codes_t = pl.pallas_call(
        kernel,
        out_shape=(
            jax.ShapeDtypeStruct((K, M), jnp.float32),   # x_dec^T
            jax.ShapeDtypeStruct((N, M), jnp.float32),   # codes^T
        ),
        grid=grid,
        in_specs=[
            pl.BlockSpec((K, tm), lambda i: (0, i)),     # x^T tile
            pl.BlockSpec((N, tm), lambda i: (0, i)),     # noise^T tile
            const_spec(we1_t.shape), const_spec(be1_t.shape),   # enc layer 1
            const_spec(we2_t.shape), const_spec(be2_t.shape),   # enc layer 2
            const_spec(wd1_t.shape), const_spec(bd1_t.shape),   # dec layer 1
            const_spec(wd2_t.shape), const_spec(bd2_t.shape),   # dec layer 2
        ],
        out_specs=(
            pl.BlockSpec((K, tm), lambda i: (0, i)),
            pl.BlockSpec((N, tm), lambda i: (0, i)),
        ),
        compiler_params=pltpu.CompilerParams(
            # M tiles are independent -> shard across v7x's 2 TensorCores.
            dimension_semantics=("parallel",),
            # <= v7x's 64 MiB/TC with headroom; raise towards 96 MiB on
            # v5e/v6e (128 MiB parts) when sweeping very large tiles.
            vmem_limit_bytes=vmem_limit_bytes,
        ),
        cost_estimate=pl.CostEstimate(
            flops=flops,
            transcendentals=transcendentals,
            bytes_accessed=bytes_accessed,
        ),
    )(x_t, noise_t, we1_t, be1_t, we2_t, be2_t, wd1_t, bd1_t, wd2_t, bd2_t)
    return xdec_t, codes_t


def channel_ae_forward(x, fwd_noise, params, *, tile_m=8192,
                       compute_dtype=jnp.float32,
                       vmem_limit_bytes=48 * 1024 * 1024):
    """(B, L, K)-interface wrapper matching the PyTorch forward.

    x: (B, L, K) f32, fwd_noise: (B, L, N) f32.
    compute_dtype=jnp.bfloat16 enables the fast path (bf16 matmul operands +
    bf16 transcendentals) recommended for v6e/v7x; default f32 matches the
    PyTorch module's numerics.
    """
    B, L, K = x.shape
    N = fwd_noise.shape[-1]
    M = B * L

    tm, M_pad = _plan_tiles(M, tile_m)

    # Layout plumbing: (B, L, K) -> (K, M_pad).  NOTE (perf review): this
    # transpose (+ pad only when M % tile != 0) is an extra HBM pass over the
    # activations; when the surrounding model can keep the (feature, sample)
    # layout end-to-end, call channel_ae_forward_lane_major directly instead.
    x_t = jnp.transpose(x.reshape(M, K))                     # (K, M)
    n_t = jnp.transpose(fwd_noise.reshape(M, N))             # (N, M)
    if M_pad != M:
        x_t = jnp.pad(x_t, ((0, 0), (0, M_pad - M)))
        n_t = jnp.pad(n_t, ((0, 0), (0, M_pad - M)))

    params_t = prepare_params(params, compute_dtype)
    xdec_t, codes_t = channel_ae_forward_lane_major(
        x_t, n_t, params_t, tile_m=tm, compute_dtype=compute_dtype,
        vmem_limit_bytes=vmem_limit_bytes)

    if M_pad != M:
        xdec_t = xdec_t[:, :M]
        codes_t = codes_t[:, :M]
    x_dec = jnp.transpose(xdec_t).reshape(B, L, K)
    codes = jnp.transpose(codes_t).reshape(B, L, N)
    return x_dec, codes


# --------------------------------------------------------------------------
# params / reference
# --------------------------------------------------------------------------
def make_params(key, K, H, N):
    ks = jax.random.split(key, 8)
    scale = 0.1
    we1 = scale * jax.random.normal(ks[0], (K, H), jnp.float32)
    be1 = scale * jax.random.normal(ks[1], (1, H), jnp.float32)
    we2 = scale * jax.random.normal(ks[2], (H, N), jnp.float32)
    be2 = scale * jax.random.normal(ks[3], (1, N), jnp.float32)
    wd1 = scale * jax.random.normal(ks[4], (N, H), jnp.float32)
    bd1 = scale * jax.random.normal(ks[5], (1, H), jnp.float32)
    wd2 = scale * jax.random.normal(ks[6], (H, K), jnp.float32)
    bd2 = scale * jax.random.normal(ks[7], (1, K), jnp.float32)
    return (we1, be1, we2, be2, wd1, bd1, wd2, bd2)


def channel_ae_reference(x, fwd_noise, params):
    """Pure-JAX f32 reference of the PyTorch forward, for correctness check."""
    (we1, be1, we2, be2, wd1, bd1, wd2, bd2) = params
    B, L, K = x.shape
    N = fwd_noise.shape[-1]
    x2 = x.reshape(-1, K)
    n2 = fwd_noise.reshape(-1, N)

    def elu(v):
        return jnp.where(v > 0, v, jnp.exp(jnp.minimum(v, 0.0)) - 1.0)

    h = elu(x2 @ we1 + be1)
    codes = jnp.tanh(h @ we2 + be2)
    received = codes + n2
    hd = elu(received @ wd1 + bd1)
    x_dec = jax.nn.sigmoid(hd @ wd2 + bd2)
    return x_dec.reshape(B, L, K), codes.reshape(B, L, N)


# --------------------------------------------------------------------------
# demo / self-check
# --------------------------------------------------------------------------
if __name__ == "__main__":
    B, L, K, H, N = 2, 16, 4, 32, 8

    key = jax.random.PRNGKey(0)
    k_x, k_noise, k_par = jax.random.split(key, 3)

    # binary message bits, as in the original model
    x = jax.random.bernoulli(k_x, 0.5, (B, L, K)).astype(jnp.float32)
    fwd_noise = 0.1 * jax.random.normal(k_noise, (B, L, N), jnp.float32)
    params = make_params(k_par, K, H, N)

    x_dec_ref, codes_ref = channel_ae_reference(x, fwd_noise, params)

    # 1) exact f32 path (module semantics)
    x_dec, codes = channel_ae_forward(x, fwd_noise, params)
    jax.block_until_ready((x_dec, codes))
    assert x_dec.shape == (B, L, K)
    assert codes.shape == (B, L, N)
    assert jnp.allclose(x_dec, x_dec_ref, atol=1e-3, rtol=1e-3)
    assert jnp.allclose(codes, codes_ref, atol=1e-3, rtol=1e-3)

    # 2) fast path (review: bf16 matmul operands + bf16 transcendentals for
    #    v6e/v7x); re-validated against the f32 reference at relaxed tolerance.
    x_dec_bf, codes_bf = channel_ae_forward(
        x, fwd_noise, params, compute_dtype=jnp.bfloat16)
    jax.block_until_ready((x_dec_bf, codes_bf))
    assert jnp.allclose(x_dec_bf, x_dec_ref, atol=2e-2, rtol=2e-2)
    assert jnp.allclose(codes_bf, codes_ref, atol=2e-2, rtol=2e-2)

    print("KERNEL_OK")
</pallas_src>

<mosaic_0001>
module attributes {stable_mosaic.version = 11 : i64} {
  func.func @channel_ae_kernel(%arg0: i32, %arg1: memref<4x128xf32, #tpu.memory_space<vmem>>, %arg2: memref<8x128xf32, #tpu.memory_space<vmem>>, %arg3: memref<32x4xf32, #tpu.memory_space<vmem>>, %arg4: memref<32x1xf32, #tpu.memory_space<vmem>>, %arg5: memref<8x32xf32, #tpu.memory_space<vmem>>, %arg6: memref<8x1xf32, #tpu.memory_space<vmem>>, %arg7: memref<32x8xf32, #tpu.memory_space<vmem>>, %arg8: memref<32x1xf32, #tpu.memory_space<vmem>>, %arg9: memref<4x32xf32, #tpu.memory_space<vmem>>, %arg10: memref<4x1xf32, #tpu.memory_space<vmem>>, %arg11: memref<4x128xf32, #tpu.memory_space<vmem>>, %arg12: memref<8x128xf32, #tpu.memory_space<vmem>>) attributes {dimension_semantics = [#tpu.dimension_semantics<parallel>], iteration_bounds = array<i64: 1>, scalar_prefetch = 0 : i64, scratch_operands = 0 : i64, tpu.core_type = #tpu.core_type<tc>, window_params = [{transform_indices = @transform_0, window_bounds = array<i64: 4, 128>}, {transform_indices = @transform_1, window_bounds = array<i64: 8, 128>}, {pipeline_mode = #tpu.pipeline_mode<synchronous>, transform_indices = @transform_2, window_bounds = array<i64: 32, 4>}, {pipeline_mode = #tpu.pipeline_mode<synchronous>, transform_indices = @transform_3, window_bounds = array<i64: 32, 1>}, {pipeline_mode = #tpu.pipeline_mode<synchronous>, transform_indices = @transform_4, window_bounds = array<i64: 8, 32>}, {pipeline_mode = #tpu.pipeline_mode<synchronous>, transform_indices = @transform_5, window_bounds = array<i64: 8, 1>}, {pipeline_mode = #tpu.pipeline_mode<synchronous>, transform_indices = @transform_6, window_bounds = array<i64: 32, 8>}, {pipeline_mode = #tpu.pipeline_mode<synchronous>, transform_indices = @transform_7, window_bounds = array<i64: 32, 1>}, {pipeline_mode = #tpu.pipeline_mode<synchronous>, transform_indices = @transform_8, window_bounds = array<i64: 4, 32>}, {pipeline_mode = #tpu.pipeline_mode<synchronous>, transform_indices = @transform_9, window_bounds = array<i64: 4, 1>}, {transform_indices = @transform_10, window_bounds = array<i64: 4, 128>}, {transform_indices = @transform_11, window_bounds = array<i64: 8, 128>}]} {
    %c0 = arith.constant 0 : index
    %c0_0 = arith.constant 0 : index
    %0 = vector.load %arg1[%c0, %c0_0] : memref<4x128xf32, #tpu.memory_space<vmem>>, vector<4x128xf32>
    %c0_1 = arith.constant 0 : index
    %c0_2 = arith.constant 0 : index
    %1 = vector.load %arg3[%c0_1, %c0_2] : memref<32x4xf32, #tpu.memory_space<vmem>>, vector<32x4xf32>
    %cst = arith.constant dense<0.000000e+00> : vector<32x128xf32>
    %2 = tpu.matmul %1, %0, %cst {dimension_numbers = #tpu.dot_dimension_numbers<[1], [0], [0], [1], [0, 0, 1, 1], [], []>} : vector<32x4xf32>, vector<4x128xf32>, vector<32x128xf32> -> vector<32x128xf32>
    %c0_3 = arith.constant 0 : index
    %c0_4 = arith.constant 0 : index
    %3 = vector.load %arg4[%c0_3, %c0_4] : memref<32x1xf32, #tpu.memory_space<vmem>>, vector<32x1xf32>
    %4 = vector.broadcast %3 : vector<32x1xf32> to vector<32x128xf32>
    %5 = arith.addf %2, %4 : vector<32x128xf32>
    %cst_5 = arith.constant 0.000000e+00 : f32
    %6 = vector.broadcast %cst_5 : f32 to vector<32x128xf32>
    %7 = arith.cmpf ogt, %5, %6 : vector<32x128xf32>
    %cst_6 = arith.constant 0.000000e+00 : f32
    %8 = vector.broadcast %cst_6 : f32 to vector<32x128xf32>
    %9 = arith.minimumf %5, %8 : vector<32x128xf32>
    %10 = math.exp %9 : vector<32x128xf32>
    %cst_7 = arith.constant 1.000000e+00 : f32
    %11 = vector.broadcast %cst_7 : f32 to vector<32x128xf32>
    %12 = arith.subf %10, %11 : vector<32x128xf32>
    %13 = arith.select %7, %5, %12 : vector<32x128xi1>, vector<32x128xf32>
    %c0_8 = arith.constant 0 : index
    %c0_9 = arith.constant 0 : index
    %14 = vector.load %arg5[%c0_8, %c0_9] : memref<8x32xf32, #tpu.memory_space<vmem>>, vector<8x32xf32>
    %cst_10 = arith.constant dense<0.000000e+00> : vector<8x128xf32>
    %15 = tpu.matmul %14, %13, %cst_10 {dimension_numbers = #tpu.dot_dimension_numbers<[1], [0], [0], [1], [0, 0, 1, 1], [], []>} : vector<8x32xf32>, vector<32x128xf32>, vector<8x128xf32> -> vector<8x128xf32>
    %c0_11 = arith.constant 0 : index
    %c0_12 = arith.constant 0 : index
    %16 = vector.load %arg6[%c0_11, %c0_12] : memref<8x1xf32, #tpu.memory_space<vmem>>, vector<8x1xf32>
    %17 = vector.broadcast %16 : vector<8x1xf32> to vector<8x128xf32>
    %18 = arith.addf %15, %17 : vector<8x128xf32>
    %19 = math.tanh %18 : vector<8x128xf32>
    %c0_13 = arith.constant 0 : index
    %c0_14 = arith.constant 0 : index
    %20 = vector.load %arg12[%c0_13, %c0_14] : memref<8x128xf32, #tpu.memory_space<vmem>>, vector<8x128xf32>
    tpu.vector_store %arg12[%c0_13, %c0_14], %19 {strides = array<i32>} : memref<8x128xf32, #tpu.memory_space<vmem>>, vector<8x128xf32>,
    %c0_15 = arith.constant 0 : index
    %c0_16 = arith.constant 0 : index
    %21 = vector.load %arg2[%c0_15, %c0_16] : memref<8x128xf32, #tpu.memory_space<vmem>>, vector<8x128xf32>
    %22 = arith.addf %19, %21 : vector<8x128xf32>
    %c0_17 = arith.constant 0 : index
    %c0_18 = arith.constant 0 : index
    %23 = vector.load %arg7[%c0_17, %c0_18] : memref<32x8xf32, #tpu.memory_space<vmem>>, vector<32x8xf32>
    %cst_19 = arith.constant dense<0.000000e+00> : vector<32x128xf32>
    %24 = tpu.matmul %23, %22, %cst_19 {dimension_numbers = #tpu.dot_dimension_numbers<[1], [0], [0], [1], [0, 0, 1, 1], [], []>} : vector<32x8xf32>, vector<8x128xf32>, vector<32x128xf32> -> vector<32x128xf32>
    %c0_20 = arith.constant 0 : index
    %c0_21 = arith.constant 0 : index
    %25 = vector.load %arg8[%c0_20, %c0_21] : memref<32x1xf32, #tpu.memory_space<vmem>>, vector<32x1xf32>
    %26 = vector.broadcast %25 : vector<32x1xf32> to vector<32x128xf32>
    %27 = arith.addf %24, %26 : vector<32x128xf32>
    %cst_22 = arith.constant 0.000000e+00 : f32
    %28 = vector.broadcast %cst_22 : f32 to vector<32x128xf32>
    %29 = arith.cmpf ogt, %27, %28 : vector<32x128xf32>
    %cst_23 = arith.constant 0.000000e+00 : f32
    %30 = vector.broadcast %cst_23 : f32 to vector<32x128xf32>
    %31 = arith.minimumf %27, %30 : vector<32x128xf32>
    %32 = math.exp %31 : vector<32x128xf32>
    %cst_24 = arith.constant 1.000000e+00 : f32
    %33 = vector.broadcast %cst_24 : f32 to vector<32x128xf32>
    %34 = arith.subf %32, %33 : vector<32x128xf32>
    %35 = arith.select %29, %27, %34 : vector<32x128xi1>, vector<32x128xf32>
    %c0_25 = arith.constant 0 : index
    %c0_26 = arith.constant 0 : index
    %36 = vector.load %arg9[%c0_25, %c0_26] : memref<4x32xf32, #tpu.memory_space<vmem>>, vector<4x32xf32>
    %cst_27 = arith.constant dense<0.000000e+00> : vector<4x128xf32>
    %37 = tpu.matmul %36, %35, %cst_27 {dimension_numbers = #tpu.dot_dimension_numbers<[1], [0], [0], [1], [0, 0, 1, 1], [], []>} : vector<4x32xf32>, vector<32x128xf32>, vector<4x128xf32> -> vector<4x128xf32>
    %c0_28 = arith.constant 0 : index
    %c0_29 = arith.constant 0 : index
    %38 = vector.load %arg10[%c0_28, %c0_29] : memref<4x1xf32, #tpu.memory_space<vmem>>, vector<4x1xf32>
    %39 = vector.broadcast %38 : vector<4x1xf32> to vector<4x128xf32>
    %40 = arith.addf %37, %39 : vector<4x128xf32>
    %cst_30 = arith.constant 5.000000e-01 : f32
    %41 = vector.broadcast %cst_30 : f32 to vector<4x128xf32>
    %42 = arith.mulf %41, %40 : vector<4x128xf32>
    %43 = math.tanh %42 : vector<4x128xf32>
    %cst_31 = arith.constant 5.000000e-01 : f32
    %44 = vector.broadcast %cst_31 : f32 to vector<4x128xf32>
    %45 = arith.mulf %44, %43 : vector<4x128xf32>
    %cst_32 = arith.constant 5.000000e-01 : f32
    %46 = vector.broadcast %cst_32 : f32 to vector<4x128xf32>
    %47 = arith.addf %45, %46 : vector<4x128xf32>
    %c0_33 = arith.constant 0 : index
    %c0_34 = arith.constant 0 : index
    %48 = vector.load %arg11[%c0_33, %c0_34] : memref<4x128xf32, #tpu.memory_space<vmem>>, vector<4x128xf32>
    tpu.vector_store %arg11[%c0_33, %c0_34], %47 {strides = array<i32>} : memref<4x128xf32, #tpu.memory_space<vmem>>, vector<4x128xf32>,
    return
  }
  func.func @transform_0(%arg0: i32) -> (i32, i32) {
    %c0_i32 = arith.constant 0 : i32
    %c0_i32_0 = arith.constant 0 : i32
    return %c0_i32, %arg0 : i32, i32
  }
  func.func @transform_1(%arg0: i32) -> (i32, i32) {
    %c0_i32 = arith.constant 0 : i32
    %c0_i32_0 = arith.constant 0 : i32
    return %c0_i32, %arg0 : i32, i32
  }
  func.func @transform_2(%arg0: i32) -> (i32, i32) {
    %c0_i32 = arith.constant 0 : i32
    %c0_i32_0 = arith.constant 0 : i32
    %c0_i32_1 = arith.constant 0 : i32
    return %c0_i32, %c0_i32_0 : i32, i32
  }
  func.func @transform_3(%arg0: i32) -> (i32, i32) {
    %c0_i32 = arith.constant 0 : i32
    %c0_i32_0 = arith.constant 0 : i32
    %c0_i32_1 = arith.constant 0 : i32
    return %c0_i32, %c0_i32_0 : i32, i32
  }
  func.func @transform_4(%arg0: i32) -> (i32, i32) {
    %c0_i32 = arith.constant 0 : i32
    %c0_i32_0 = arith.constant 0 : i32
    %c0_i32_1 = arith.constant 0 : i32
    return %c0_i32, %c0_i32_0 : i32, i32
  }
  func.func @transform_5(%arg0: i32) -> (i32, i32) {
    %c0_i32 = arith.constant 0 : i32
    %c0_i32_0 = arith.constant 0 : i32
    %c0_i32_1 = arith.constant 0 : i32
    return %c0_i32, %c0_i32_0 : i32, i32
  }
  func.func @transform_6(%arg0: i32) -> (i32, i32) {
    %c0_i32 = arith.constant 0 : i32
    %c0_i32_0 = arith.constant 0 : i32
    %c0_i32_1 = arith.constant 0 : i32
    return %c0_i32, %c0_i32_0 : i32, i32
  }
  func.func @transform_7(%arg0: i32) -> (i32, i32) {
    %c0_i32 = arith.constant 0 : i32
    %c0_i32_0 = arith.constant 0 : i32
    %c0_i32_1 = arith.constant 0 : i32
    return %c0_i32, %c0_i32_0 : i32, i32
  }
  func.func @transform_8(%arg0: i32) -> (i32, i32) {
    %c0_i32 = arith.constant 0 : i32
    %c0_i32_0 = arith.constant 0 : i32
    %c0_i32_1 = arith.constant 0 : i32
    return %c0_i32, %c0_i32_0 : i32, i32
  }
  func.func @transform_9(%arg0: i32) -> (i32, i32) {
    %c0_i32 = arith.constant 0 : i32
    %c0_i32_0 = arith.constant 0 : i32
    %c0_i32_1 = arith.constant 0 : i32
    return %c0_i32, %c0_i32_0 : i32, i32
  }
  func.func @transform_10(%arg0: i32) -> (i32, i32) {
    %c0_i32 = arith.constant 0 : i32
    %c0_i32_0 = arith.constant 0 : i32
    return %c0_i32, %arg0 : i32, i32
  }
  func.func @transform_11(%arg0: i32) -> (i32, i32) {
    %c0_i32 = arith.constant 0 : i32
    %c0_i32_0 = arith.constant 0 : i32
    return %c0_i32, %arg0 : i32, i32
  }
}

</mosaic_0001>

<llo_original>
// kernel: tpu_custom_call.1
$region0: #{tpu_custom_call.1}
  #allocation0 [shape = 'u32[]', space=smem, size = 0x4, offset = 0x4, fixed_abs, tag = 'smem constant byte address 0x4 - core index']
  #allocation1 [shape = 'u32[144,128]{1,0:T(1,128)}', space=vmem, size = 0x12000, scoped, tag = 'internal scratch']
  %s0 = inlined_call_operand.vmem [shape: f32[4,128], index: 0, kind: input, shape index: {}]
  %s1 = inlined_call_operand.vmem [shape: f32[8,128], index: 1, kind: input, shape index: {}]
  %s2 = inlined_call_operand.vmem [shape: f32[32,4], index: 2, kind: input, shape index: {}]
  %s3 = inlined_call_operand.vmem [shape: f32[32,1], index: 3, kind: input, shape index: {}]
  %s4 = inlined_call_operand.vmem [shape: f32[8,32], index: 4, kind: input, shape index: {}]
  %s5 = inlined_call_operand.vmem [shape: f32[8,1], index: 5, kind: input, shape index: {}]
  %s6 = inlined_call_operand.vmem [shape: f32[32,8], index: 6, kind: input, shape index: {}]
  %s7 = inlined_call_operand.vmem [shape: f32[32,1], index: 7, kind: input, shape index: {}]
  %s8 = inlined_call_operand.vmem [shape: f32[4,32], index: 8, kind: input, shape index: {}]
  %s9 = inlined_call_operand.vmem [shape: f32[4,1], index: 9, kind: input, shape index: {}]
  %s10 = inlined_call_operand.hbm [shape: f32[4,128], index: 10, kind: output, shape index: {0}]
  %s11 = inlined_call_operand.hbm [shape: f32[8,128], index: 11, kind: output, shape index: {1}]
  %12 = xla_tuple %s10, %s11
  %s13 = sld [smem:[#allocation0]]
  $region58: #{tpu_custom_call.1} parent=0
    _
  %s15 = ssub.s32 1, %s13
  %s16 = scalar_select 0, %s15, %s13
  $region1: #{tpu_custom_call.1} parent=0
    #allocation2 [shape = 'u8[2048]{0}', space=vmem, size = 0x800, scoped, tag = 'output window, operand 0, single buffered']
    #allocation3 [shape = 's32[1]{0}', space=sflag, size = 0x4, scoped, tag = 'scoped memory for tpu_custom_call.1']
    #allocation4 [shape = 'u8[4096]{0}', space=vmem, size = 0x1000, scoped, tag = 'output window, operand 1, single buffered']
    #allocation5 [shape = 's32[1]{0}', space=sflag, size = 0x4, scoped, tag = 'scoped memory for tpu_custom_call.1']
    %17 = vsyncpa [#allocation3], 0
    %18 = vsyncpa [#allocation5], 0
    // Predicated region
    $region2: #{tpu_custom_call.1} parent=1 // pred_check
      _
    $region3: #{tpu_custom_call.1} parent=1 // pred_check_branch
      %20 = sbr.rel (0) target = $region5
    $region4: #{tpu_custom_call.1} parent=1 // pred_region
      _
    $region5: #{tpu_custom_call.1} parent=1 // pred_fallthru
      _
    // Predicated region
    $region6: #{tpu_custom_call.1} parent=1 // pred_check
      _
    $region7: #{tpu_custom_call.1} parent=1 // pred_check_branch
      %22 = sbr.rel (0) target = $region9
    $region8: #{tpu_custom_call.1} parent=1 // pred_region
      _
    $region9: #{tpu_custom_call.1} parent=1 // pred_fallthru
      _
    // Predicated region
    $region10: #{tpu_custom_call.1} parent=1 // pred_check
      _
    $region11: #{tpu_custom_call.1} parent=1 // pred_check_branch
      %24 = sbr.rel (0) target = $region13
    $region12: #{tpu_custom_call.1} parent=1 // pred_region
      _
    $region13: #{tpu_custom_call.1} parent=1 // pred_fallthru
      _
    // Predicated region
    $region14: #{tpu_custom_call.1} parent=1 // pred_check
      _
    $region15: #{tpu_custom_call.1} parent=1 // pred_check_branch
      %26 = sbr.rel (0) target = $region17
    $region16: #{tpu_custom_call.1} parent=1 // pred_region
      _
    $region17: #{tpu_custom_call.1} parent=1 // pred_fallthru
      _
    // Predicated region
    $region18: #{tpu_custom_call.1} parent=1 // pred_check
      _
    $region19: #{tpu_custom_call.1} parent=1 // pred_check_branch
      %28 = sbr.rel (0) target = $region21
    $region20: #{tpu_custom_call.1} parent=1 // pred_region
      _
    $region21: #{tpu_custom_call.1} parent=1 // pred_fallthru
      _
    // Predicated region
    $region22: #{tpu_custom_call.1} parent=1 // pred_check
      _
    $region23: #{tpu_custom_call.1} parent=1 // pred_check_branch
      %30 = sbr.rel (0) target = $region25
    $region24: #{tpu_custom_call.1} parent=1 // pred_region
      _
    $region25: #{tpu_custom_call.1} parent=1 // pred_fallthru
      _
    // Predicated region
    $region26: #{tpu_custom_call.1} parent=1 // pred_check
      _
    $region27: #{tpu_custom_call.1} parent=1 // pred_check_branch
      %32 = sbr.rel (0) target = $region29
    $region28: #{tpu_custom_call.1} parent=1 // pred_region
      _
    $region29: #{tpu_custom_call.1} parent=1 // pred_fallthru
      _
    // Predicated region
    $region30: #{tpu_custom_call.1} parent=1 // pred_check
      _
    $region31: #{tpu_custom_call.1} parent=1 // pred_check_branch
      %34 = sbr.rel (0) target = $region33
    $region32: #{tpu_custom_call.1} parent=1 // pred_region
      _
    $region33: #{tpu_custom_call.1} parent=1 // pred_fallthru
      _
    // Predicated region
    $region34: #{tpu_custom_call.1} parent=1 // pred_check
      _
    $region35: #{tpu_custom_call.1} parent=1 // pred_check_branch
      %36 = sbr.rel (0) target = $region37
    $region36: #{tpu_custom_call.1} parent=1 // pred_region
      _
    $region37: #{tpu_custom_call.1} parent=1 // pred_fallthru
      _
    // Predicated region
    $region38: #{tpu_custom_call.1} parent=1 // pred_check
      _
    $region39: #{tpu_custom_call.1} parent=1 // pred_check_branch
      %38 = sbr.rel (0) target = $region41
    $region40: #{tpu_custom_call.1} parent=1 // pred_region
      _
    $region41: #{tpu_custom_call.1} parent=1 // pred_fallthru
      _
    %v39 = vld [vmem:[%s0] sm:$0xf]
    %v40 = vld [vmem:[%s2] sm:$0xff]
    %v41 = vld [vmem:[%s2 + $0x8] sm:$0xff]
    %v42 = vld [vmem:[%s2 + $0x10] sm:$0xff]
    %v43 = vld [vmem:[%s2 + $0x18] sm:$0xff]
    %v44 = vld [vmem:[%s3] sm:$0xff]
    %v45 = vld [vmem:[%s3 + $0x8] sm:$0xff]
    %v46 = vld [vmem:[%s3 + $0x10] sm:$0xff]
    %v47 = vld [vmem:[%s3 + $0x18] sm:$0xff]
    %49 = vset.pattern.permute.xlu0 0
    %50 = vperm.xlu0 %49, %v44
    %v51 = vpop.permute.xlu0 %50
    %54 = vset.pattern.permute.xlu0 0
    %55 = vperm.xlu0 %54, %v45
    %v56 = vpop.permute.xlu0 %55
    %59 = vset.pattern.permute.xlu0 0
    %60 = vperm.xlu0 %59, %v46
    %v61 = vpop.permute.xlu0 %60
    %64 = vset.pattern.permute.xlu0 0
    %65 = vperm.xlu0 %64, %v47
    %v66 = vpop.permute.xlu0 %65
    %vm68 = vcmask 31744
    %v70 = vsel %vm68, %v40, 0
    %v73 = vsel %vm68, %v41, 0
    %v76 = vsel %vm68, %v42, 0
    %v79 = vsel %vm68, %v43, 0
    %vm81 = vcmask 1043456
    %v83 = vsel %vm81, %v39, 0
    %85 = vmatprep.subr.mxu0 0.0
    %86 = vmatpush1.msra.mxu0 %v83
    %87 = vmatprep.subr.mxu0 0.0
    %88 = vmatpush1.msra.mxu0 0.0
    %89 = vmatprep.subr.mxu0 0.0
    %90 = vmatpush1.msra.mxu0 0.0
    %91 = vmatprep.subr.mxu0 0.0
    %92 = vmatpush1.msra.mxu0 0.0
    %93 = vmatprep.subr.mxu0 0.0
    %94 = vmatpush1.msra.mxu0 0.0
    %95 = vmatprep.subr.mxu0 0.0
    %96 = vmatpush1.msra.mxu0 0.0
    %97 = vmatprep.subr.mxu0 0.0
    %98 = vmatpush1.msra.mxu0 0.0
    %99 = vmatprep.subr.mxu0 0.0
    %100 = vmatpush1.msra.mxu0 0.0
    %101 = vmatprep.subr.mxu0 0.0
    %102 = vmatpush1.msra.mxu0 0.0
    %103 = vmatprep.subr.mxu0 0.0
    %104 = vmatpush1.msra.mxu0 0.0
    %105 = vmatprep.subr.mxu0 0.0
    %106 = vmatpush1.msra.mxu0 0.0
    %107 = vmatprep.subr.mxu0 0.0
    %108 = vmatpush1.msra.mxu0 0.0
    %109 = vmatprep.subr.mxu0 0.0
    %110 = vmatpush1.msra.mxu0 0.0
    %111 = vmatprep.subr.mxu0 0.0
    %112 = vmatpush1.msra.mxu0 0.0
    %113 = vmatprep.subr.mxu0 0.0
    %114 = vmatpush1.msra.mxu0 0.0
    %115 = vmatprep.subr.mxu0 0.0
    %116 = vmatpush1.msra.mxu0 0.0
    %117 = vmatprep.subr.mxu0 0.0
    %118 = vmatpush1.msra.mxu0 0.0
    %119 = vmatprep.subr.mxu0 0.0
    %120 = vmatpush1.msra.mxu0 0.0
    %121 = vmatprep.subr.mxu0 0.0
    %122 = vmatpush1.msra.mxu0 0.0
    %123 = vmatprep.subr.mxu0 0.0
    %124 = vmatpush1.msra.mxu0 0.0
    %125 = vmatprep.subr.mxu0 0.0
    %126 = vmatpush1.msra.mxu0 0.0
    %127 = vmatprep.subr.mxu0 0.0
    %128 = vmatpush1.msra.mxu0 0.0
    %129 = vmatprep.subr.mxu0 0.0
    %130 = vmatpush1.msra.mxu0 0.0
    %131 = vmatprep.subr.mxu0 0.0
    %132 = vmatpush1.msra.mxu0 0.0
    %133 = vmatprep.subr.mxu0 0.0
    %134 = vmatpush1.msra.mxu0 0.0
    %135 = vmatprep.subr.mxu0 0.0
    %136 = vmatpush1.msra.mxu0 0.0
    %137 = vmatprep.subr.mxu0 0.0
    %138 = vmatpush1.msra.mxu0 0.0
    %139 = vmatprep.subr.mxu0 0.0
    %140 = vmatpush1.msra.mxu0 0.0
    %141 = vmatprep.subr.mxu0 0.0
    %142 = vmatpush1.msra.mxu0 0.0
    %143 = vmatprep.subr.mxu0 0.0
    %144 = vmatpush1.msra.mxu0 0.0
    %145 = vmatprep.subr.mxu0 0.0
    %146 = vmatpush1.msra.mxu0 0.0
    %147 = vmatprep.subr.mxu0 0.0
    %148 = vmatpush1.msra.mxu0 0.0
    %149 = vmatprep.mubr.f32.mxu0 0.0
    %150 = vmatmul.mubr.f32.gmra.mrb[0].mxu0 %v70
    %v151 = vpop.f32.mrb[0].mxu0
    %v152 = vadd.f32 %v51, %v151
    %v153 = vpop.f32.mrb[0].mxu0
    %154 = vmatprep.mubr.f32.mxu0 0.0
    %155 = vmatmul.mubr.f32.gmra.mrb[0].mxu0 %v73
    %v156 = vpop.f32.mrb[0].mxu0
    %v157 = vadd.f32 %v56, %v156
    %v158 = vpop.f32.mrb[0].mxu0
    %159 = vmatprep.mubr.f32.mxu0 0.0
    %160 = vmatmul.mubr.f32.gmra.mrb[0].mxu0 %v76
    %v161 = vpop.f32.mrb[0].mxu0
    %v162 = vadd.f32 %v61, %v161
    %v163 = vpop.f32.mrb[0].mxu0
    %164 = vmatprep.mubr.f32.mxu0 0.0
    %165 = vmatmul.mubr.f32.gmra.mrb[0].mxu0 %v79
    %v166 = vpop.f32.mrb[0].mxu0
    %v167 = vadd.f32 %v66, %v166
    %v168 = vpop.f32.mrb[0].mxu0
    %169 = vdwg.mxu0
    %vm170 = vcmp.gt.f32.partialorder %v152, 0.0
    %vm171 = vcmp.gt.f32.partialorder %v157, 0.0
    %vm172 = vcmp.gt.f32.partialorder %v162, 0.0
    %vm173 = vcmp.gt.f32.partialorder %v167, 0.0
    %v174 = vmin.f32 %v152, 0.0
    %v175 = vmin.f32 %v157, 0.0
    %v176 = vmin.f32 %v162, 0.0
    %v177 = vmin.f32 %v167, 0.0
    %v178 = vmul.f32 %v174, 1.442695
    %v179 = vpow.pop %v178
    %v180 = vmul.f32 %v175, 1.442695
    %v181 = vpow.pop %v180
    %v182 = vmul.f32 %v176, 1.442695
    %v183 = vpow.pop %v182
    %v184 = vmul.f32 %v177, 1.442695
    %v185 = vpow.pop %v184
    %v186 = vsub.f32 %v179, 1.0
    %v187 = vsub.f32 %v181, 1.0
    %v188 = vsub.f32 %v183, 1.0
    %v189 = vsub.f32 %v185, 1.0
    %v190 = vsel %vm170, %v152, %v186
    %v191 = vsel %vm171, %v157, %v187
    %v192 = vsel %vm172, %v162, %v188
    %v193 = vsel %vm173, %v167, %v189
    %v194 = vld [vmem:[%s4] sm:$0xff]
    %v195 = vld [vmem:[%s5] sm:$0xff]
    %197 = vset.pattern.permute.xlu0 0
    %198 = vperm.xlu0 %197, %v195
    %v199 = vpop.permute.xlu0 %198
    %vm201 = vcmask 261120
    %v203 = vsel %vm201, %v194, 0
    %205 = vmatprep.subr.mxu0 0.0
    %206 = vmatpush1.msra.mxu0 %v190
    %207 = vmatprep.subr.mxu0 0.0
    %208 = vmatpush1.msra.mxu0 %v191
    %209 = vmatprep.subr.mxu0 0.0
    %210 = vmatpush1.msra.mxu0 %v192
    %211 = vmatprep.subr.mxu0 0.0
    %212 = vmatpush1.msra.mxu0 %v193
    %213 = vmatprep.subr.mxu0 0.0
    %214 = vmatpush1.msra.mxu0 0.0
    %215 = vmatprep.subr.mxu0 0.0
    %216 = vmatpush1.msra.mxu0 0.0
    %217 = vmatprep.subr.mxu0 0.0
    %218 = vmatpush1.msra.mxu0 0.0
    %219 = vmatprep.subr.mxu0 0.0
    %220 = vmatpush1.msra.mxu0 0.0
    %221 = vmatprep.subr.mxu0 0.0
    %222 = vmatpush1.msra.mxu0 0.0
    %223 = vmatprep.subr.mxu0 0.0
    %224 = vmatpush1.msra.mxu0 0.0
    %225 = vmatprep.subr.mxu0 0.0
    %226 = vmatpush1.msra.mxu0 0.0
    %227 = vmatprep.subr.mxu0 0.0
    %228 = vmatpush1.msra.mxu0 0.0
    %229 = vmatprep.subr.mxu0 0.0
    %230 = vmatpush1.msra.mxu0 0.0
    %231 = vmatprep.subr.mxu0 0.0
    %232 = vmatpush1.msra.mxu0 0.0
    %233 = vmatprep.subr.mxu0 0.0
    %234 = vmatpush1.msra.mxu0 0.0
    %235 = vmatprep.subr.mxu0 0.0
    %236 = vmatpush1.msra.mxu0 0.0
    %237 = vmatprep.subr.mxu0 0.0
    %238 = vmatpush1.msra.mxu0 0.0
    %239 = vmatprep.subr.mxu0 0.0
    %240 = vmatpush1.msra.mxu0 0.0
    %241 = vmatprep.subr.mxu0 0.0
    %242 = vmatpush1.msra.mxu0 0.0
    %243 = vmatprep.subr.mxu0 0.0
    %244 = vmatpush1.msra.mxu0 0.0
    %245 = vmatprep.subr.mxu0 0.0
    %246 = vmatpush1.msra.mxu0 0.0
    %247 = vmatprep.subr.mxu0 0.0
    %248 = vmatpush1.msra.mxu0 0.0
    %249 = vmatprep.subr.mxu0 0.0
    %250 = vmatpush1.msra.mxu0 0.0
    %251 = vmatprep.subr.mxu0 0.0
    %252 = vmatpush1.msra.mxu0 0.0
    %253 = vmatprep.subr.mxu0 0.0
    %254 = vmatpush1.msra.mxu0 0.0
    %255 = vmatprep.subr.mxu0 0.0
    %256 = vmatpush1.msra.mxu0 0.0
    %257 = vmatprep.subr.mxu0 0.0
    %258 = vmatpush1.msra.mxu0 0.0
    %259 = vmatprep.subr.mxu0 0.0
    %260 = vmatpush1.msra.mxu0 0.0
    %261 = vmatprep.subr.mxu0 0.0
    %262 = vmatpush1.msra.mxu0 0.0
    %263 = vmatprep.subr.mxu0 0.0
    %264 = vmatpush1.msra.mxu0 0.0
    %265 = vmatprep.subr.mxu0 0.0
    %266 = vmatpush1.msra.mxu0 0.0
    %267 = vmatprep.subr.mxu0 0.0
    %268 = vmatpush1.msra.mxu0 0.0
    %269 = vmatprep.mubr.f32.mxu0 0.0
    %270 = vmatmul.mubr.f32.gmra.mrb[0].mxu0 %v203
    %v271 = vpop.f32.mrb[0].mxu0
    %v272 = vadd.f32 %v199, %v271
    %v273 = vpop.f32.mrb[0].mxu0
    %274 = vdwg.mxu0
    %v275 = vtanh.pop %v272
    %276 = vst [vmem:[#allocation4] sm:$0xff] %v275
    %v277 = vld [vmem:[%s1] sm:$0xff]
    %v278 = vadd.f32 %v275, %v277
    %v279 = vld [vmem:[%s6] sm:$0xff]
    %v280 = vld [vmem:[%s6 + $0x8] sm:$0xff]
    %v281 = vld [vmem:[%s6 + $0x10] sm:$0xff]
    %v282 = vld [vmem:[%s6 + $0x18] sm:$0xff]
    %v283 = vld [vmem:[%s7] sm:$0xff]
    %v284 = vld [vmem:[%s7 + $0x8] sm:$0xff]
    %v285 = vld [vmem:[%s7 + $0x10] sm:$0xff]
    %v286 = vld [vmem:[%s7 + $0x18] sm:$0xff]
    %288 = vset.pattern.permute.xlu0 0
    %289 = vperm.xlu0 %288, %v283
    %v290 = vpop.permute.xlu0 %289
    %293 = vset.pattern.permute.xlu0 0
    %294 = vperm.xlu0 %293, %v284
    %v295 = vpop.permute.xlu0 %294
    %298 = vset.pattern.permute.xlu0 0
    %299 = vperm.xlu0 %298, %v285
    %v300 = vpop.permute.xlu0 %299
    %303 = vset.pattern.permute.xlu0 0
    %304 = vperm.xlu0 %303, %v286
    %v305 = vpop.permute.xlu0 %304
    %vm307 = vcmask 64512
    %v309 = vsel %vm307, %v279, 0
    %v312 = vsel %vm307, %v280, 0
    %v315 = vsel %vm307, %v281, 0
    %v318 = vsel %vm307, %v282, 0
    %320 = vmatprep.subr.mxu0 0.0
    %321 = vmatpush1.msra.mxu0 %v278
    %322 = vmatprep.subr.mxu0 0.0
    %323 = vmatpush1.msra.mxu0 0.0
    %324 = vmatprep.subr.mxu0 0.0
    %325 = vmatpush1.msra.mxu0 0.0
    %326 = vmatprep.subr.mxu0 0.0
    %327 = vmatpush1.msra.mxu0 0.0
    %328 = vmatprep.subr.mxu0 0.0
    %329 = vmatpush1.msra.mxu0 0.0
    %330 = vmatprep.subr.mxu0 0.0
    %331 = vmatpush1.msra.mxu0 0.0
    %332 = vmatprep.subr.mxu0 0.0
    %333 = vmatpush1.msra.mxu0 0.0
    %334 = vmatprep.subr.mxu0 0.0
    %335 = vmatpush1.msra.mxu0 0.0
    %336 = vmatprep.subr.mxu0 0.0
    %337 = vmatpush1.msra.mxu0 0.0
    %338 = vmatprep.subr.mxu0 0.0
    %339 = vmatpush1.msra.mxu0 0.0
    %340 = vmatprep.subr.mxu0 0.0
    %341 = vmatpush1.msra.mxu0 0.0
    %342 = vmatprep.subr.mxu0 0.0
    %343 = vmatpush1.msra.mxu0 0.0
    %344 = vmatprep.subr.mxu0 0.0
    %345 = vmatpush1.msra.mxu0 0.0
    %346 = vmatprep.subr.mxu0 0.0
    %347 = vmatpush1.msra.mxu0 0.0
    %348 = vmatprep.subr.mxu0 0.0
    %349 = vmatpush1.msra.mxu0 0.0
    %350 = vmatprep.subr.mxu0 0.0
    %351 = vmatpush1.msra.mxu0 0.0
    %352 = vmatprep.subr.mxu0 0.0
    %353 = vmatpush1.msra.mxu0 0.0
    %354 = vmatprep.subr.mxu0 0.0
    %355 = vmatpush1.msra.mxu0 0.0
    %356 = vmatprep.subr.mxu0 0.0
    %357 = vmatpush1.msra.mxu0 0.0
    %358 = vmatprep.subr.mxu0 0.0
    %359 = vmatpush1.msra.mxu0 0.0
    %360 = vmatprep.subr.mxu0 0.0
    %361 = vmatpush1.msra.mxu0 0.0
    %362 = vmatprep.subr.mxu0 0.0
    %363 = vmatpush1.msra.mxu0 0.0
    %364 = vmatprep.subr.mxu0 0.0
    %365 = vmatpush1.msra.mxu0 0.0
    %366 = vmatprep.subr.mxu0 0.0
    %367 = vmatpush1.msra.mxu0 0.0
    %368 = vmatprep.subr.mxu0 0.0
    %369 = vmatpush1.msra.mxu0 0.0
    %370 = vmatprep.subr.mxu0 0.0
    %371 = vmatpush1.msra.mxu0 0.0
    %372 = vmatprep.subr.mxu0 0.0
    %373 = vmatpush1.msra.mxu0 0.0
    %374 = vmatprep.subr.mxu0 0.0
    %375 = vmatpush1.msra.mxu0 0.0
    %376 = vmatprep.subr.mxu0 0.0
    %377 = vmatpush1.msra.mxu0 0.0
    %378 = vmatprep.subr.mxu0 0.0
    %379 = vmatpush1.msra.mxu0 0.0
    %380 = vmatprep.subr.mxu0 0.0
    %381 = vmatpush1.msra.mxu0 0.0
    %382 = vmatprep.subr.mxu0 0.0
    %383 = vmatpush1.msra.mxu0 0.0
    %384 = vmatprep.mubr.f32.mxu0 0.0
    %385 = vmatmul.mubr.f32.gmra.mrb[0].mxu0 %v309
    %v386 = vpop.f32.mrb[0].mxu0
    %v387 = vadd.f32 %v290, %v386
    %v388 = vpop.f32.mrb[0].mxu0
    %389 = vmatprep.mubr.f32.mxu0 0.0
    %390 = vmatmul.mubr.f32.gmra.mrb[0].mxu0 %v312
    %v391 = vpop.f32.mrb[0].mxu0
    %v392 = vadd.f32 %v295, %v391
    %v393 = vpop.f32.mrb[0].mxu0
    %394 = vmatprep.mubr.f32.mxu0 0.0
    %395 = vmatmul.mubr.f32.gmra.mrb[0].mxu0 %v315
    %v396 = vpop.f32.mrb[0].mxu0
    %v397 = vadd.f32 %v300, %v396
    %v398 = vpop.f32.mrb[0].mxu0
    %399 = vmatprep.mubr.f32.mxu0 0.0
    %400 = vmatmul.mubr.f32.gmra.mrb[0].mxu0 %v318
    %v401 = vpop.f32.mrb[0].mxu0
    %v402 = vadd.f32 %v305, %v401
    %v403 = vpop.f32.mrb[0].mxu0
    %404 = vdwg.mxu0
    %vm405 = vcmp.gt.f32.partialorder %v387, 0.0
    %vm406 = vcmp.gt.f32.partialorder %v392, 0.0
    %vm407 = vcmp.gt.f32.partialorder %v397, 0.0
    %vm408 = vcmp.gt.f32.partialorder %v402, 0.0
    %v409 = vmin.f32 %v387, 0.0
    %v410 = vmin.f32 %v392, 0.0
    %v411 = vmin.f32 %v397, 0.0
    %v412 = vmin.f32 %v402, 0.0
    %v413 = vmul.f32 %v409, 1.442695
    %v414 = vpow.pop %v413
    %v415 = vmul.f32 %v410, 1.442695
    %v416 = vpow.pop %v415
    %v417 = vmul.f32 %v411, 1.442695
    %v418 = vpow.pop %v417
    %v419 = vmul.f32 %v412, 1.442695
    %v420 = vpow.pop %v419
    %v421 = vsub.f32 %v414, 1.0
    %v422 = vsub.f32 %v416, 1.0
    %v423 = vsub.f32 %v418, 1.0
    %v424 = vsub.f32 %v420, 1.0
    %v425 = vsel %vm405, %v387, %v421
    %v426 = vsel %vm406, %v392, %v422
    %v427 = vsel %vm407, %v397, %v423
    %v428 = vsel %vm408, %v402, %v424
    %v429 = vld [vmem:[%s8] sm:$0xf]
    %v430 = vld [vmem:[%s9] sm:$0xf]
    %432 = vset.pattern.permute.xlu0 0
    %433 = vperm.xlu0 %432, %v430
    %v434 = vpop.permute.xlu0 %433
    %v437 = vsel %vm201, %v429, 0
    %439 = vmatprep.subr.mxu0 0.0
    %440 = vmatpush1.msra.mxu0 %v425
    %441 = vmatprep.subr.mxu0 0.0
    %442 = vmatpush1.msra.mxu0 %v426
    %443 = vmatprep.subr.mxu0 0.0
    %444 = vmatpush1.msra.mxu0 %v427
    %445 = vmatprep.subr.mxu0 0.0
    %446 = vmatpush1.msra.mxu0 %v428
    %447 = vmatprep.subr.mxu0 0.0
    %448 = vmatpush1.msra.mxu0 0.0
    %449 = vmatprep.subr.mxu0 0.0
    %450 = vmatpush1.msra.mxu0 0.0
    %451 = vmatprep.subr.mxu0 0.0
    %452 = vmatpush1.msra.mxu0 0.0
    %453 = vmatprep.subr.mxu0 0.0
    %454 = vmatpush1.msra.mxu0 0.0
    %455 = vmatprep.subr.mxu0 0.0
    %456 = vmatpush1.msra.mxu0 0.0
    %457 = vmatprep.subr.mxu0 0.0
    %458 = vmatpush1.msra.mxu0 0.0
    %459 = vmatprep.subr.mxu0 0.0
    %460 = vmatpush1.msra.mxu0 0.0
    %461 = vmatprep.subr.mxu0 0.0
    %462 = vmatpush1.msra.mxu0 0.0
    %463 = vmatprep.subr.mxu0 0.0
    %464 = vmatpush1.msra.mxu0 0.0
    %465 = vmatprep.subr.mxu0 0.0
    %466 = vmatpush1.msra.mxu0 0.0
    %467 = vmatprep.subr.mxu0 0.0
    %468 = vmatpush1.msra.mxu0 0.0
    %469 = vmatprep.subr.mxu0 0.0
    %470 = vmatpush1.msra.mxu0 0.0
    %471 = vmatprep.subr.mxu0 0.0
    %472 = vmatpush1.msra.mxu0 0.0
    %473 = vmatprep.subr.mxu0 0.0
    %474 = vmatpush1.msra.mxu0 0.0
    %475 = vmatprep.subr.mxu0 0.0
    %476 = vmatpush1.msra.mxu0 0.0
    %477 = vmatprep.subr.mxu0 0.0
    %478 = vmatpush1.msra.mxu0 0.0
    %479 = vmatprep.subr.mxu0 0.0
    %480 = vmatpush1.msra.mxu0 0.0
    %481 = vmatprep.subr.mxu0 0.0
    %482 = vmatpush1.msra.mxu0 0.0
    %483 = vmatprep.subr.mxu0 0.0
    %484 = vmatpush1.msra.mxu0 0.0
    %485 = vmatprep.subr.mxu0 0.0
    %486 = vmatpush1.msra.mxu0 0.0
    %487 = vmatprep.subr.mxu0 0.0
    %488 = vmatpush1.msra.mxu0 0.0
    %489 = vmatprep.subr.mxu0 0.0
    %490 = vmatpush1.msra.mxu0 0.0
    %491 = vmatprep.subr.mxu0 0.0
    %492 = vmatpush1.msra.mxu0 0.0
    %493 = vmatprep.subr.mxu0 0.0
    %494 = vmatpush1.msra.mxu0 0.0
    %495 = vmatprep.subr.mxu0 0.0
    %496 = vmatpush1.msra.mxu0 0.0
    %497 = vmatprep.subr.mxu0 0.0
    %498 = vmatpush1.msra.mxu0 0.0
    %499 = vmatprep.subr.mxu0 0.0
    %500 = vmatpush1.msra.mxu0 0.0
    %501 = vmatprep.subr.mxu0 0.0
    %502 = vmatpush1.msra.mxu0 0.0
    %503 = vmatprep.mubr.f32.mxu0 0.0
    %504 = vmatmul.mubr.f32.gmra.mrb[0].mxu0 %v437
    %v505 = vpop.f32.mrb[0].mxu0
    %v506 = vadd.f32 %v434, %v505
    %v507 = vpop.f32.mrb[0].mxu0
    %508 = vdwg.mxu0
    %v509 = vmul.f32 %v506, 0.5
    %v510 = vtanh.pop %v509
    %v511 = vmul.f32 %v510, 0.5
    %v512 = vadd.f32 %v511, 0.5
    %513 = vst [vmem:[#allocation2] sm:$0xf] %v512
    // Predicated region
    $region42: #{tpu_custom_call.1} parent=1 // pred_check
      _
    $region43: #{tpu_custom_call.1} parent=1 // pred_check_branch
      %515 = sbr.rel (0) target = $region45
    $region44: #{tpu_custom_call.1} parent=1 // pred_region
      %s517 = ssub.s32 64, 64
      %518 = vsyncadd [#allocation3], %s517
      %s520 = sshll.u32 [#allocation2], 4
      %s521 = int_to_ptr.vmem [resolvable:$true] %s520
      %523 = dma.vmem_to_hbm [thread:$0]  %s521, 64, %s10, [#allocation3]
    $region45: #{tpu_custom_call.1} parent=1 // pred_fallthru
      _
    // Predicated region
    $region46: #{tpu_custom_call.1} parent=1 // pred_check
      _
    $region47: #{tpu_custom_call.1} parent=1 // pred_check_branch
      %525 = sbr.rel (0) target = $region49
    $region48: #{tpu_custom_call.1} parent=1 // pred_region
      %s527 = ssub.s32 128, 128
      %528 = vsyncadd [#allocation5], %s527
      %s530 = sshll.u32 [#allocation4], 4
      %s531 = int_to_ptr.vmem [resolvable:$true] %s530
      %533 = dma.vmem_to_hbm [thread:$0]  %s531, 128, %s11, [#allocation5]
    $region49: #{tpu_custom_call.1} parent=1 // pred_fallthru
      _
    // Predicated region
    $region50: #{tpu_custom_call.1} parent=1 // pred_check
      _
    $region51: #{tpu_custom_call.1} parent=1 // pred_check_branch
      %535 = sbr.rel (0) target = $region53
    $region52: #{tpu_custom_call.1} parent=1 // pred_region
      %536 = dma.done [#allocation3], 64
    $region53: #{tpu_custom_call.1} parent=1 // pred_fallthru
      _
    // Predicated region
    $region54: #{tpu_custom_call.1} parent=1 // pred_check
      _
    $region55: #{tpu_custom_call.1} parent=1 // pred_check_branch
      %538 = sbr.rel (0) target = $region57
    $region56: #{tpu_custom_call.1} parent=1 // pred_region
      %539 = dma.done [#allocation5], 128
    $region57: #{tpu_custom_call.1} parent=1 // pred_fallthru
      _
    %540 = vsyncpa [#allocation3], 1
    %541 = vsyncpa [#allocation5], 1

</llo_original>
